<compile_context>
chip_gen: v5e
topology: v5e:2x2
jax: 0.10.0
libtpu: 0.0.40
codegen_flags: <defaults>
</compile_context>

<pallas_src>
import functools

import jax
import jax.numpy as jnp
from jax import lax
from jax.experimental import pallas as pl
from jax.experimental.pallas import tpu as pltpu

MARGIN = 1.0
EPS = 1e-6  # PyTorch PairwiseDistance default eps


def _contrastive_loss_kernel(o1_ref, o2_ref, lbl_ref, out_ref, *,
                             batch, block_rows, margin, need_mask):
    o1 = o1_ref[...].astype(jnp.float32)        # (TB, D)
    o2 = o2_ref[...].astype(jnp.float32)        # (TB, D)
    lbl = lbl_ref[...].astype(jnp.float32)      # (TB, 1)

    diff = o1 - o2 + EPS                        # PairwiseDistance: ||x1 - x2 + eps||
    sq_sum = jnp.sum(diff * diff, axis=-1, keepdims=True)   # (TB, 1) == d^2
    dist = jnp.sqrt(sq_sum)                     # only needed for the margin branch
    sq_margin = jnp.square(jnp.maximum(margin - dist, 0.0))

    per_row = lbl * sq_sum + (1.0 - lbl) * sq_margin         # (TB, 1)

    if need_mask:
        # Zero padded rows of a ragged tail block (select, not multiply, so
        # NaN/inf garbage in the padded region cannot leak through).
        i = pl.program_id(0)
        row_ids = i * block_rows + lax.broadcasted_iota(jnp.int32, per_row.shape, 0)
        per_row = jnp.where(row_ids < batch, per_row, 0.0)

    out_ref[...] = per_row                      # independent per-block output


def _pick_block_rows(batch, dim, itemsize):
    """Pick a batch tile so 2 inputs x 2 pipeline buffers stay ~<= 32 MiB."""
    budget_bytes = 32 * 1024 * 1024
    per_row_bytes = max(4 * dim * itemsize, 1)   # 2 inputs x 2 buffers
    tb = budget_bytes // per_row_bytes
    tb = int(max(8, min(1024, tb)))
    tb -= tb % 8                                  # keep second-minor dim /8
    return max(tb, 8)


def contrastive_loss(output1, output2, label, *, margin=MARGIN, block_rows=None):
    """output1, output2: [B, D]; label: [B] (0/1). Returns scalar f32 loss."""
    B, D = output1.shape
    itemsize = jnp.dtype(output1.dtype).itemsize

    if block_rows is None:
        block_rows = _pick_block_rows(B, D, itemsize)
    if block_rows >= B:
        block_rows = B                            # block == full dim: always legal
    else:
        block_rows = max(8, (block_rows // 8) * 8)
        block_rows = min(block_rows, B)

    grid_n = pl.cdiv(B, block_rows)
    b_pad = grid_n * block_rows
    need_mask = (b_pad != B)

    label2d = label.reshape(B, 1).astype(jnp.float32)   # tiny; cheap to cast here

    kernel = functools.partial(
        _contrastive_loss_kernel,
        batch=B, block_rows=block_rows, margin=float(margin),
        need_mask=need_mask)

    cost = pl.CostEstimate(
        flops=int(3 * B * D + 8 * B),
        transcendentals=int(B),
        bytes_accessed=int(2 * B * D * itemsize + B * 4 + b_pad * 4),
    )

    per_row = pl.pallas_call(
        kernel,
        out_shape=jax.ShapeDtypeStruct((b_pad, 1), jnp.float32),
        grid=(grid_n,),
        in_specs=[
            pl.BlockSpec((block_rows, D), lambda i: (i, 0)),
            pl.BlockSpec((block_rows, D), lambda i: (i, 0)),
            pl.BlockSpec((block_rows, 1), lambda i: (i, 0)),
        ],
        out_specs=pl.BlockSpec((block_rows, 1), lambda i: (i, 0)),
        compiler_params=pltpu.CompilerParams(
            dimension_semantics=("parallel",),   # independent blocks -> megacore OK
            vmem_limit_bytes=40 * 1024 * 1024,
        ),
        cost_estimate=cost,
    )(output1, output2, label2d)

    # Tiny (B-element) final reduction + mean done by XLA.
    return jnp.sum(per_row) * jnp.float32(1.0 / B)


def contrastive_loss_ref(output1, output2, label, margin=MARGIN):
    """Pure-JAX reference matching the PyTorch module."""
    diff = output1.astype(jnp.float32) - output2.astype(jnp.float32) + EPS
    dist = jnp.sqrt(jnp.sum(diff * diff, axis=-1))
    sq_d = jnp.square(dist)
    sq_m = jnp.square(jnp.maximum(margin - dist, 0.0))
    lbl = label.astype(jnp.float32)
    return jnp.mean(lbl * sq_d + (1.0 - lbl) * sq_m)


if __name__ == "__main__":
    key = jax.random.PRNGKey(0)
    k1, k2, k3 = jax.random.split(key, 3)

    # Ragged batch (B % TB != 0) to exercise the tiled grid + tail masking.
    B, D = 50, 32
    output1 = jax.random.normal(k1, (B, D), dtype=jnp.float32)
    output2 = jax.random.normal(k2, (B, D), dtype=jnp.float32)
    label = jax.random.bernoulli(k3, 0.5, (B,)).astype(jnp.float32)

    loss = jax.block_until_ready(contrastive_loss(output1, output2, label,
                                                  block_rows=16))
    ref = jax.block_until_ready(contrastive_loss_ref(output1, output2, label))
    assert jnp.allclose(loss, ref, rtol=1e-5, atol=1e-5), (loss, ref)

    # Small single-block case (auto tile selection).
    B2, D2 = 8, 32
    o1 = jax.random.normal(k1, (B2, D2), dtype=jnp.float32)
    o2 = jax.random.normal(k2, (B2, D2), dtype=jnp.float32)
    lab = jax.random.bernoulli(k3, 0.5, (B2,)).astype(jnp.float32)
    loss2 = jax.block_until_ready(contrastive_loss(o1, o2, lab))
    ref2 = jax.block_until_ready(contrastive_loss_ref(o1, o2, lab))
    assert jnp.allclose(loss2, ref2, rtol=1e-5, atol=1e-5), (loss2, ref2)

    print("KERNEL_OK")
</pallas_src>

<mosaic_0001>
module attributes {stable_mosaic.version = 11 : i64} {
  func.func @_contrastive_loss_kernel(%arg0: i32, %arg1: memref<16x32xf32, #tpu.memory_space<vmem>>, %arg2: memref<16x32xf32, #tpu.memory_space<vmem>>, %arg3: memref<16x1xf32, #tpu.memory_space<vmem>>, %arg4: memref<16x1xf32, #tpu.memory_space<vmem>>) attributes {dimension_semantics = [#tpu.dimension_semantics<parallel>], iteration_bounds = array<i64: 4>, scalar_prefetch = 0 : i64, scratch_operands = 0 : i64, tpu.core_type = #tpu.core_type<tc>, window_params = [{transform_indices = @transform_0, window_bounds = array<i64: 16, 32>}, {transform_indices = @transform_1, window_bounds = array<i64: 16, 32>}, {transform_indices = @transform_2, window_bounds = array<i64: 16, 1>}, {transform_indices = @transform_3, window_bounds = array<i64: 16, 1>}]} {
    %c0 = arith.constant 0 : index
    %c0_0 = arith.constant 0 : index
    %0 = vector.load %arg1[%c0, %c0_0] : memref<16x32xf32, #tpu.memory_space<vmem>>, vector<16x32xf32>
    %c0_1 = arith.constant 0 : index
    %c0_2 = arith.constant 0 : index
    %1 = vector.load %arg2[%c0_1, %c0_2] : memref<16x32xf32, #tpu.memory_space<vmem>>, vector<16x32xf32>
    %c0_3 = arith.constant 0 : index
    %c0_4 = arith.constant 0 : index
    %2 = vector.load %arg3[%c0_3, %c0_4] : memref<16x1xf32, #tpu.memory_space<vmem>>, vector<16x1xf32>
    %3 = arith.subf %0, %1 : vector<16x32xf32>
    %cst = arith.constant 9.99999997E-7 : f32
    %4 = vector.broadcast %cst : f32 to vector<16x32xf32>
    %5 = arith.addf %3, %4 : vector<16x32xf32>
    %6 = arith.mulf %5, %5 : vector<16x32xf32>
    %cst_5 = arith.constant dense<0.000000e+00> : vector<16xf32>
    %7 = vector.multi_reduction <add>, %6, %cst_5 [1] : vector<16x32xf32> to vector<16xf32>
    %8 = vector.shape_cast %7 : vector<16xf32> to vector<16x1xf32>
    %9 = math.sqrt %8 : vector<16x1xf32>
    %cst_6 = arith.constant 1.000000e+00 : f32
    %10 = vector.broadcast %cst_6 : f32 to vector<16x1xf32>
    %11 = arith.subf %10, %9 : vector<16x1xf32>
    %cst_7 = arith.constant 0.000000e+00 : f32
    %12 = vector.broadcast %cst_7 : f32 to vector<16x1xf32>
    %13 = arith.maximumf %11, %12 : vector<16x1xf32>
    %14 = arith.mulf %13, %13 : vector<16x1xf32>
    %15 = arith.mulf %2, %8 : vector<16x1xf32>
    %cst_8 = arith.constant 1.000000e+00 : f32
    %16 = vector.broadcast %cst_8 : f32 to vector<16x1xf32>
    %17 = arith.subf %16, %2 : vector<16x1xf32>
    %18 = arith.mulf %17, %14 : vector<16x1xf32>
    %19 = arith.addf %15, %18 : vector<16x1xf32>
    %c16_i32 = arith.constant 16 : i32
    %20 = arith.muli %arg0, %c16_i32 : i32
    %21 = tpu.iota {dimensions = array<i32: 0>} : vector<16x1xi32>
    %22 = vector.broadcast %20 : i32 to vector<16x1xi32>
    %23 = arith.addi %22, %21 : vector<16x1xi32>
    %c50_i32 = arith.constant 50 : i32
    %24 = vector.broadcast %c50_i32 : i32 to vector<16x1xi32>
    %25 = arith.cmpi slt, %23, %24 : vector<16x1xi32>
    %cst_9 = arith.constant 0.000000e+00 : f32
    %26 = vector.broadcast %cst_9 : f32 to vector<16x1xf32>
    %27 = arith.select %25, %19, %26 : vector<16x1xi1>, vector<16x1xf32>
    %c0_10 = arith.constant 0 : index
    %c0_11 = arith.constant 0 : index
    %28 = vector.load %arg4[%c0_10, %c0_11] : memref<16x1xf32, #tpu.memory_space<vmem>>, vector<16x1xf32>
    tpu.vector_store %arg4[%c0_10, %c0_11], %27 {strides = array<i32>} : memref<16x1xf32, #tpu.memory_space<vmem>>, vector<16x1xf32>,
    return
  }
  func.func @transform_0(%arg0: i32) -> (i32, i32) {
    %c0_i32 = arith.constant 0 : i32
    %c0_i32_0 = arith.constant 0 : i32
    return %arg0, %c0_i32 : i32, i32
  }
  func.func @transform_1(%arg0: i32) -> (i32, i32) {
    %c0_i32 = arith.constant 0 : i32
    %c0_i32_0 = arith.constant 0 : i32
    return %arg0, %c0_i32 : i32, i32
  }
  func.func @transform_2(%arg0: i32) -> (i32, i32) {
    %c0_i32 = arith.constant 0 : i32
    %c0_i32_0 = arith.constant 0 : i32
    return %arg0, %c0_i32 : i32, i32
  }
  func.func @transform_3(%arg0: i32) -> (i32, i32) {
    %c0_i32 = arith.constant 0 : i32
    %c0_i32_0 = arith.constant 0 : i32
    return %arg0, %c0_i32 : i32, i32
  }
}

</mosaic_0001>

<llo_original>
// kernel: tpu_custom_call.1
$region0: #{tpu_custom_call.1}
  #allocation0 [shape = 'u32[]', space=smem, size = 0x4, offset = 0x4, fixed_abs, tag = 'smem constant byte address 0x4 - core index']
  #allocation1 [shape = 'u32[72,128]{1,0:T(1,128)}', space=vmem, size = 0x9000, scoped, tag = 'internal scratch']
  %s0 = inlined_call_operand.vmem [shape: f32[50,32], index: 0, kind: input, shape index: {}]
  %s1 = inlined_call_operand.vmem [shape: f32[50,32], index: 1, kind: input, shape index: {}]
  %s2 = inlined_call_operand.vmem [shape: f32[50,1], index: 2, kind: input, shape index: {}]
  %s3 = inlined_call_operand.vmem [shape: f32[64,1], index: 3, kind: output, shape index: {}]
  %s4 = sld [smem:[#allocation0]]
  $region45: #{tpu_custom_call.1} parent=0
    _
  %s6 = ssub.s32 1, %s4
  %s7 = scalar_select 0, %s6, %s4
  loop: start=0, step=1, limit=6
  $region2: #{tpu_custom_call.1} parent=0 // loop_pre_header
    _
  $region3: #{tpu_custom_call.1} parent=0 // loop_header
    %s9 = sphi 0, %s13
    %p10 = scmp.ge.s32.totalorder %s9, 6
    %s19 = sphi 0, %s21
    %s22 = sphi 0, %s19
    %s23 = sphi 0, %s22
    %s39 = sphi 0, %s23
    %s45 = sphi 0, %s47
    %s48 = sphi 0, %s45
    %s49 = sphi 0, %s48
    %s65 = sphi 0, %s49
    %s71 = sphi 0, %s73
    %s74 = sphi 0, %s71
    %s75 = sphi 0, %s74
    %s91 = sphi 0, %s75
    %s97 = sphi 0, %s99
    %s100 = sphi 0, %s97
    %s101 = sphi 0, %s100
    %s117 = sphi 0, %s101
  $region4: #{tpu_custom_call.1} parent=0 // loop_header_branch
    %12 = sbr.rel (%p10) target = $region8
  $region5: #{tpu_custom_call.1} parent=0 // loop_body
    %s14 = ssub.s32 %s9, 1
    %s15 = ssub.s32 %s9, 2
    %s16 = sadd.s32 %s9, 1
    %s17 = ssub.s32 %s9, %s16
    %p18 = scmp.eq.s32.totalorder %s17, 0
    %s20 = sadd.s32 %s19, 1
    %s21 = scalar_select %p18, %s19, %s20
    %p24 = pneg %p18
    %p25 = scmp.eq.s32.totalorder %s9, 3
    %p26 = por %p24, %p25
    %p27 = scmp.ne.s32.totalorder %s19, %s22
    %p28 = scmp.eq.s32.totalorder %s9, 0
    %p29 = por %p27, %p28
    %p30 = scmp.ne.s32.totalorder %s19, %s22
    %p31 = scmp.eq.s32.totalorder %s14, 3
    %p32 = por %p30, %p31
    %p33 = scmp.ne.s32.totalorder %s22, %s23
    %p34 = scmp.eq.s32.totalorder %s14, 0
    %p35 = por %p33, %p34
    %p36 = scmp.ne.s32.totalorder %s22, %s23
    %p37 = scmp.eq.s32.totalorder %s15, 3
    %p38 = por %p36, %p37
    %p40 = scmp.ne.s32.totalorder %s23, %s39
    %p41 = scmp.eq.s32.totalorder %s15, 0
    %p42 = por %p40, %p41
    %s43 = ssub.s32 %s9, %s16
    %p44 = scmp.eq.s32.totalorder %s43, 0
    %s46 = sadd.s32 %s45, 1
    %s47 = scalar_select %p44, %s45, %s46
    %p50 = pneg %p44
    %p51 = scmp.eq.s32.totalorder %s9, 3
    %p52 = por %p50, %p51
    %p53 = scmp.ne.s32.totalorder %s45, %s48
    %p54 = scmp.eq.s32.totalorder %s9, 0
    %p55 = por %p53, %p54
    %p56 = scmp.ne.s32.totalorder %s45, %s48
    %p57 = scmp.eq.s32.totalorder %s14, 3
    %p58 = por %p56, %p57
    %p59 = scmp.ne.s32.totalorder %s48, %s49
    %p60 = scmp.eq.s32.totalorder %s14, 0
    %p61 = por %p59, %p60
    %p62 = scmp.ne.s32.totalorder %s48, %s49
    %p63 = scmp.eq.s32.totalorder %s15, 3
    %p64 = por %p62, %p63
    %p66 = scmp.ne.s32.totalorder %s49, %s65
    %p67 = scmp.eq.s32.totalorder %s15, 0
    %p68 = por %p66, %p67
    %s69 = ssub.s32 %s9, %s16
    %p70 = scmp.eq.s32.totalorder %s69, 0
    %s72 = sadd.s32 %s71, 1
    %s73 = scalar_select %p70, %s71, %s72
    %p76 = pneg %p70
    %p77 = scmp.eq.s32.totalorder %s9, 3
    %p78 = por %p76, %p77
    %p79 = scmp.ne.s32.totalorder %s71, %s74
    %p80 = scmp.eq.s32.totalorder %s9, 0
    %p81 = por %p79, %p80
    %p82 = scmp.ne.s32.totalorder %s71, %s74
    %p83 = scmp.eq.s32.totalorder %s14, 3
    %p84 = por %p82, %p83
    %p85 = scmp.ne.s32.totalorder %s74, %s75
    %p86 = scmp.eq.s32.totalorder %s14, 0
    %p87 = por %p85, %p86
    %p88 = scmp.ne.s32.totalorder %s74, %s75
    %p89 = scmp.eq.s32.totalorder %s15, 3
    %p90 = por %p88, %p89
    %p92 = scmp.ne.s32.totalorder %s75, %s91
    %p93 = scmp.eq.s32.totalorder %s15, 0
    %p94 = por %p92, %p93
    %s95 = ssub.s32 %s9, %s16
    %p96 = scmp.eq.s32.totalorder %s95, 0
    %s98 = sadd.s32 %s97, 1
    %s99 = scalar_select %p96, %s97, %s98
    %p102 = pneg %p96
    %p103 = scmp.eq.s32.totalorder %s9, 3
    %p104 = por %p102, %p103
    %p105 = scmp.ne.s32.totalorder %s97, %s100
    %p106 = scmp.eq.s32.totalorder %s9, 0
    %p107 = por %p105, %p106
    %p108 = scmp.ne.s32.totalorder %s97, %s100
    %p109 = scmp.eq.s32.totalorder %s14, 3
    %p110 = por %p108, %p109
    %p111 = scmp.ne.s32.totalorder %s100, %s101
    %p112 = scmp.eq.s32.totalorder %s14, 0
    %p113 = por %p111, %p112
    %p114 = scmp.ne.s32.totalorder %s100, %s101
    %p115 = scmp.eq.s32.totalorder %s15, 3
    %p116 = por %p114, %p115
    %p118 = scmp.ne.s32.totalorder %s101, %s117
    %p119 = scmp.eq.s32.totalorder %s15, 0
    %p120 = por %p118, %p119
    %p121 = scmp.le.s32.totalorder 1, %s9
    %p122 = scmp.lt.s32.totalorder %s9, 5
    %p123 = pnand %p121, %p122
    %p124 = pneg %p123
    // Predicated region
    $region9: #{tpu_custom_call.1} parent=5 // pred_check
      _
    $region10: #{tpu_custom_call.1} parent=5 // pred_check_branch
      %126 = sbr.rel (%p123) target = $region12
    $region11: #{tpu_custom_call.1} parent=5 // pred_region
      %s127 = ssub.s32 %s9, 1
    $region12: #{tpu_custom_call.1} parent=5 // pred_fallthru
      _
    %p128 = scmp.lt.s32.totalorder %s9, 4
    // Predicated region
    $region13: #{tpu_custom_call.1} parent=5 // pred_check
      %p129 = pneg %p128
    $region14: #{tpu_custom_call.1} parent=5 // pred_check_branch
      %131 = sbr.rel (%p129) target = $region16
    $region15: #{tpu_custom_call.1} parent=5 // pred_region
      // Predicated region
      $region17: #{tpu_custom_call.1} parent=15 // pred_check
        %p132 = pneg %p29
      $region18: #{tpu_custom_call.1} parent=15 // pred_check_branch
        %134 = sbr.rel (%p132) target = $region20
      $region19: #{tpu_custom_call.1} parent=15 // pred_region
        %s135 = smul.u32 2, %s9
        %s136 = ssub.s32 7, %s135
        %p137 = scmp.lt.s32.totalorder %s136, 2
        %s138 = scalar_select %p137, %s136, 2
        %s139 = smul.u32 8, %s138
        %p140 = scmp.lt.s32.totalorder %s135, 6
        %s141 = scalar_select %p140, %s135, 6
        %s142 = smul.addr %s141, 8
        %s143 = scalar_lea.vmem %s0, %s142
        %s144 = smul.u32 2, %s9
        %s145 = ssub.s32 7, %s144
        %p146 = scmp.lt.s32.totalorder %s145, 2
        %s147 = scalar_select %p146, %s145, 2
        %s148 = smul.u32 8, %s147
      $region20: #{tpu_custom_call.1} parent=15 // pred_fallthru
        _
      // Predicated region
      $region21: #{tpu_custom_call.1} parent=15 // pred_check
        %p149 = pneg %p55
      $region22: #{tpu_custom_call.1} parent=15 // pred_check_branch
        %151 = sbr.rel (%p149) target = $region24
      $region23: #{tpu_custom_call.1} parent=15 // pred_region
        %s152 = smul.u32 2, %s9
        %s153 = ssub.s32 7, %s152
        %p154 = scmp.lt.s32.totalorder %s153, 2
        %s155 = scalar_select %p154, %s153, 2
        %s156 = smul.u32 8, %s155
        %p157 = scmp.lt.s32.totalorder %s152, 6
        %s158 = scalar_select %p157, %s152, 6
        %s159 = smul.addr %s158, 8
        %s160 = scalar_lea.vmem %s1, %s159
        %s161 = smul.u32 2, %s9
        %s162 = ssub.s32 7, %s161
        %p163 = scmp.lt.s32.totalorder %s162, 2
        %s164 = scalar_select %p163, %s162, 2
        %s165 = smul.u32 8, %s164
      $region24: #{tpu_custom_call.1} parent=15 // pred_fallthru
        _
      // Predicated region
      $region25: #{tpu_custom_call.1} parent=15 // pred_check
        %p166 = pneg %p81
      $region26: #{tpu_custom_call.1} parent=15 // pred_check_branch
        %168 = sbr.rel (%p166) target = $region28
      $region27: #{tpu_custom_call.1} parent=15 // pred_region
        %s169 = smul.u32 2, %s9
        %s170 = ssub.s32 7, %s169
        %p171 = scmp.lt.s32.totalorder %s170, 2
        %s172 = scalar_select %p171, %s170, 2
        %s173 = smul.u32 8, %s172
        %p174 = scmp.lt.s32.totalorder %s169, 6
        %s175 = scalar_select %p174, %s169, 6
        %s176 = smul.addr %s175, 8
        %s177 = scalar_lea.vmem %s2, %s176
        %s178 = smul.u32 2, %s9
        %s179 = ssub.s32 7, %s178
        %p180 = scmp.lt.s32.totalorder %s179, 2
        %s181 = scalar_select %p180, %s179, 2
        %s182 = smul.u32 8, %s181
      $region28: #{tpu_custom_call.1} parent=15 // pred_fallthru
        _
    $region16: #{tpu_custom_call.1} parent=5 // pred_fallthru
      _
    %p183 = scmp.le.s32.totalorder 1, %s9
    %p184 = scmp.lt.s32.totalorder %s9, 5
    %p185 = pnand %p183, %p184
    %p186 = pneg %p185
    // Predicated region
    $region29: #{tpu_custom_call.1} parent=5 // pred_check
      _
    $region30: #{tpu_custom_call.1} parent=5 // pred_check_branch
      %188 = sbr.rel (%p185) target = $region32
    $region31: #{tpu_custom_call.1} parent=5 // pred_region
      %s189 = ssub.s32 %s9, 1
      %s190 = smul.u32 2, %s14
      %s191 = ssub.s32 7, %s190
      %p192 = scmp.lt.s32.totalorder %s191, 2
      %s193 = scalar_select %p192, %s191, 2
      %s194 = smul.u32 8, %s193
      %p195 = scmp.lt.s32.totalorder %s190, 6
      %s196 = scalar_select %p195, %s190, 6
      %s197 = smul.addr %s196, 8
      %s198 = scalar_lea.vmem %s0, %s197
      %p199 = pneg %p35
      %p200 = pneg %p32
      %s201 = smul.u32 2, %s14
      %s202 = ssub.s32 7, %s201
      %p203 = scmp.lt.s32.totalorder %s202, 2
      %s204 = scalar_select %p203, %s202, 2
      %s205 = smul.u32 8, %s204
      %p206 = scmp.lt.s32.totalorder %s201, 6
      %s207 = scalar_select %p206, %s201, 6
      %s208 = smul.addr %s207, 8
      %s209 = scalar_lea.vmem %s1, %s208
      %p210 = pneg %p61
      %p211 = pneg %p58
      %s212 = smul.u32 2, %s14
      %s213 = ssub.s32 7, %s212
      %p214 = scmp.lt.s32.totalorder %s213, 2
      %s215 = scalar_select %p214, %s213, 2
      %s216 = smul.u32 8, %s215
      %p217 = scmp.lt.s32.totalorder %s212, 6
      %s218 = scalar_select %p217, %s212, 6
      %s219 = smul.addr %s218, 8
      %s220 = scalar_lea.vmem %s2, %s219
      %p221 = pneg %p87
      %p222 = pneg %p84
      %p223 = pneg %p113
      %p224 = pneg %p110
      %s225 = smul.u32 2, %s14
      %p226 = scmp.lt.s32.totalorder %s225, 7
      %s227 = scalar_select %p226, %s225, 7
      %s228 = smul.addr %s227, 8
      %s229 = scalar_lea.vmem %s3, %s228
      %s230 = smul.u32 2, %s14
      %s231 = ssub.s32 7, %s230
      %p232 = scmp.lt.s32.totalorder %s231, 2
      %s233 = scalar_select %p232, %s231, 2
      %s234 = smul.u32 8, %s233
      %p235 = scmp.lt.s32.totalorder %s230, 6
      %s236 = scalar_select %p235, %s230, 6
      %s237 = smul.addr %s236, 8
      %s238 = scalar_lea.vmem %s0, %s237
      %s239 = smul.u32 2, %s14
      %s240 = ssub.s32 7, %s239
      %p241 = scmp.lt.s32.totalorder %s240, 2
      %s242 = scalar_select %p241, %s240, 2
      %s243 = smul.u32 8, %s242
      %s244 = smul.u32 2, %s14
      %s245 = ssub.s32 7, %s244
      %p246 = scmp.lt.s32.totalorder %s245, 2
      %s247 = scalar_select %p246, %s245, 2
      %s248 = smul.u32 8, %s247
      %p249 = scmp.lt.s32.totalorder %s244, 6
      %s250 = scalar_select %p249, %s244, 6
      %s251 = smul.addr %s250, 8
      %s252 = scalar_lea.vmem %s1, %s251
      %s253 = smul.u32 2, %s14
      %s254 = ssub.s32 7, %s253
      %p255 = scmp.lt.s32.totalorder %s254, 2
      %s256 = scalar_select %p255, %s254, 2
      %s257 = smul.u32 8, %s256
      %s258 = smul.u32 2, %s14
      %s259 = ssub.s32 7, %s258
      %p260 = scmp.lt.s32.totalorder %s259, 2
      %s261 = scalar_select %p260, %s259, 2
      %s262 = smul.u32 8, %s261
      %p263 = scmp.lt.s32.totalorder %s258, 6
      %s264 = scalar_select %p263, %s258, 6
      %s265 = smul.addr %s264, 8
      %s266 = scalar_lea.vmem %s2, %s265
      %s267 = smul.u32 2, %s14
      %s268 = ssub.s32 7, %s267
      %p269 = scmp.lt.s32.totalorder %s268, 2
      %s270 = scalar_select %p269, %s268, 2
      %s271 = smul.u32 8, %s270
      %s272 = smul.u32 2, %s14
      %p273 = scmp.lt.s32.totalorder %s272, 7
      %s274 = scalar_select %p273, %s272, 7
      %s275 = smul.addr %s274, 8
      %s276 = scalar_lea.vmem %s3, %s275
      %s277 = smul.u32 2, %s14
      %v278 = vld [vmem:[%s238] sm:$0xff]
      %v279 = vld [vmem:[%s238 + $0x8] sm:$0xff]
      %v280 = vld [vmem:[%s252] sm:$0xff]
      %v281 = vld [vmem:[%s252 + $0x8] sm:$0xff]
      %v282 = vld [vmem:[%s266] sm:$0xff]
      %v283 = vld [vmem:[%s266 + $0x8] sm:$0xff]
      %v284 = vsub.f32 %v278, %v280
      %v285 = vsub.f32 %v279, %v281
      %v286 = vadd.f32 %v284, 1e-06
      %v287 = vadd.f32 %v285, 1e-06
      %v288 = vmul.f32 %v286, %v286
      %v289 = vmul.f32 %v287, %v287
      %vm290 = vcmask 261120
      %v291 = vsel %vm290, %v288, 0.0
      %292 = vadd.xlane.f32.xlu0 %v291
      %v293 = vpop.xlane.xlu0 %292
      %v294 = vsel %vm290, %v289, 0.0
      %295 = vadd.xlane.f32.xlu0 %v294
      %v296 = vpop.xlane.xlu0 %295
      %v297 = vrsqrt.pop %v293
      %v298 = vmul.f32 %v297, %v293
      %v299 = vmul.f32 %v298, %v297
      %v300 = vmul.f32 0.5, %v299
      %v301 = vsub.f32 1.5, %v300
      %v302 = vmul.f32 %v297, %v301
      %v303 = vmul.f32 %v293, %v302
      %vm304 = vcmp.eq.f32.partialorder %v293, inf
      %v305 = vsel %vm304, %v293, %v303
      %vm306 = vcmp.eq.f32.partialorder %v293, 0.0
      %v307 = vand.u32 %v293, 2147483648
      %v308 = vsel %vm306, %v307, %v305
      %v309 = vrsqrt.pop %v296
      %v310 = vmul.f32 %v309, %v296
      %v311 = vmul.f32 %v310, %v309
      %v312 = vmul.f32 0.5, %v311
      %v313 = vsub.f32 1.5, %v312
      %v314 = vmul.f32 %v309, %v313
      %v315 = vmul.f32 %v296, %v314
      %vm316 = vcmp.eq.f32.partialorder %v296, inf
      %v317 = vsel %vm316, %v296, %v315
      %vm318 = vcmp.eq.f32.partialorder %v296, 0.0
      %v319 = vand.u32 %v296, 2147483648
      %v320 = vsel %vm318, %v319, %v317
      %v321 = vsub.f32 1.0, %v308
      %v322 = vsub.f32 1.0, %v320
      %v323 = vmax.f32 %v321, 0.0
      %v324 = vmax.f32 %v322, 0.0
      %v325 = vmul.f32 %v323, %v323
      %v326 = vmul.f32 %v324, %v324
      %v327 = vmul.f32 %v282, %v293
      %v328 = vmul.f32 %v283, %v296
      %v329 = vsub.f32 1.0, %v282
      %v330 = vsub.f32 1.0, %v283
      %v331 = vmul.f32 %v329, %v325
      %v332 = vmul.f32 %v330, %v326
      %v333 = vadd.f32 %v327, %v331
      %v334 = vadd.f32 %v328, %v332
      %s335 = smul.u32 %s14, 16
      %v336 = vlaneseq
      %v337 = vshrl.u32 %v336, 7
      %v338 = vadd.s32 %v337, 8
      %v339 = vstv %s335
      %v340 = vadd.s32 %v339, %v337
      %v341 = vadd.s32 %v339, %v338
      %vm342 = vcmp.lt.s32.totalorder %v340, 50
      %vm343 = vcmp.lt.s32.totalorder %v341, 50
      %v344 = vsel %vm342, %v333, 0.0
      %v345 = vsel %vm343, %v334, 0.0
      %vm346 = vcmask 7168
      %347 = vst.msk [vmem:[%s276] sm:$0xff] %vm346, %v344
      %348 = vst.msk [vmem:[%s276 + $0x8] sm:$0xff] %vm346, %v345
      %s349 = smul.u32 2, %s14
      %p350 = scmp.lt.s32.totalorder %s349, 7
      %s351 = scalar_select %p350, %s349, 7
      %s352 = smul.addr %s351, 8
      %s353 = scalar_lea.vmem %s3, %s352
      // Predicated region
      $region33: #{tpu_custom_call.1} parent=31 // pred_check
        %p354 = pneg %p110
      $region34: #{tpu_custom_call.1} parent=31 // pred_check_branch
        %356 = sbr.rel (%p354) target = $region36
      $region35: #{tpu_custom_call.1} parent=31 // pred_region
        %s357 = smul.u32 2, %s14
      $region36: #{tpu_custom_call.1} parent=31 // pred_fallthru
        _
    $region32: #{tpu_custom_call.1} parent=5 // pred_fallthru
      _
    %p358 = scmp.le.s32.totalorder 2, %s9
    // Predicated region
    $region37: #{tpu_custom_call.1} parent=5 // pred_check
      %p359 = pneg %p358
    $region38: #{tpu_custom_call.1} parent=5 // pred_check_branch
      %361 = sbr.rel (%p359) target = $region40
    $region39: #{tpu_custom_call.1} parent=5 // pred_region
      %s362 = ssub.s32 %s9, 2
      // Predicated region
      $region41: #{tpu_custom_call.1} parent=39 // pred_check
        %p363 = pneg %p116
      $region42: #{tpu_custom_call.1} parent=39 // pred_check_branch
        %365 = sbr.rel (%p363) target = $region44
      $region43: #{tpu_custom_call.1} parent=39 // pred_region
        %s366 = smul.u32 2, %s15
        %p367 = scmp.lt.s32.totalorder %s366, 7
        %s368 = scalar_select %p367, %s366, 7
        %s369 = smul.addr %s368, 8
        %s370 = scalar_lea.vmem %s3, %s369
      $region44: #{tpu_custom_call.1} parent=39 // pred_fallthru
        _
    $region40: #{tpu_custom_call.1} parent=5 // pred_fallthru
      _
  $region6: #{tpu_custom_call.1} parent=0 // loop_footer
    %s13 = sadd.s32 1, %s9
  $region7: #{tpu_custom_call.1} parent=0 // loop_footer_branch
    %8 = sbr.rel target = $region3
  $region8: #{tpu_custom_call.1} parent=0 // loop_exit
    _

</llo_original>
